<compile_context>
chip_gen: v6e
topology: v6e:2x2x1
jax: 0.10.0
libtpu: 0.0.40
codegen_flags: <defaults>
</compile_context>

<pallas_src>
from functools import partial

import numpy as np
import jax
import jax.numpy as jnp
from jax.experimental import pallas as pl
from jax.experimental.pallas import tpu as pltpu


def _round_up(x, m):
    return ((x + m - 1) // m) * m


_VMEM_LIMIT = 32 * 1024 * 1024   # safe on v5e/v6e (128 MiB) and v7x (64 MiB)


# --------------------------------------------------------------------------
# Pallas kernel 1: matmul with K-resident (pre-padded bf16) weights and fused
# bias + optional ReLU.  Used by every conv via im2col.
# --------------------------------------------------------------------------
def _matmul_kernel(a_ref, b_ref, bias_ref, o_ref, *, relu):
    out = jnp.dot(a_ref[...], b_ref[...], preferred_element_type=jnp.float32)
    out = out + bias_ref[...]
    if relu:
        out = jnp.maximum(out, 0.0)
    o_ref[...] = out.astype(o_ref.dtype)


def pallas_matmul(a, w_mat, bias, relu=False, out_dtype=jnp.float32, n_out=None):
    """relu(a @ w_mat + bias).

    a      : (M, K)  any float dtype (cast to bf16 here)
    w_mat  : (Kp, Np) bf16, pre-padded (Kp, Np multiples of 128, zero padding)
    bias   : (1, Np)  f32, pre-padded
    returns: (M, n_out or Np) in out_dtype
    """
    M, K = a.shape
    Kp, Np = w_mat.shape
    assert Kp % 128 == 0 and Np % 128 == 0 and Kp >= K

    a = a.astype(jnp.bfloat16)

    # M tile: big tiles for big M, >=2 tiles whenever M allows (megacore / 2-TC).
    if M >= 1024:
        tm = 512
    elif M >= 16:
        tm = _round_up((M + 1) // 2, 8)
    else:
        tm = _round_up(M, 8)
    Mp = _round_up(M, tm)
    if Mp != M or Kp != K:
        a = jnp.pad(a, ((0, Mp - M), (0, Kp - K)))

    tn = 256 if Np % 256 == 0 else 128
    grid = (Mp // tm, Np // tn)

    out = pl.pallas_call(
        partial(_matmul_kernel, relu=relu),
        out_shape=jax.ShapeDtypeStruct((Mp, Np), out_dtype),
        grid=grid,
        in_specs=[
            pl.BlockSpec((tm, Kp), lambda i, j: (i, 0)),
            pl.BlockSpec((Kp, tn), lambda i, j: (0, j)),
            pl.BlockSpec((1, tn), lambda i, j: (0, j)),
        ],
        out_specs=pl.BlockSpec((tm, tn), lambda i, j: (i, j)),
        compiler_params=pltpu.CompilerParams(
            dimension_semantics=("parallel", "parallel"),
            vmem_limit_bytes=_VMEM_LIMIT),
    )(a, w_mat, bias)

    n_out = Np if n_out is None else n_out
    return out[:M, :n_out]


# --------------------------------------------------------------------------
# Pallas kernel 2: fused point-feature linear + ReLU + AdaIN.
# Produces both the chained hidden (bf16, padded) and the AdaIN feature (f32).
# --------------------------------------------------------------------------
def _pc_lin_adain_kernel(pc_ref, w_ref, b_ref, m_ref, s_ref, h_ref, o_ref, *, n_valid):
    h = jnp.dot(pc_ref[0], w_ref[...], preferred_element_type=jnp.float32)
    h = jnp.maximum(h + b_ref[...], 0.0)                    # (N, Fp) f32
    h_ref[0] = h.astype(h_ref.dtype)

    mean = jnp.mean(h, axis=0, keepdims=True)
    var = jnp.sum((h - mean) ** 2, axis=0, keepdims=True) / (n_valid - 1)
    xn = (h - mean) / (jnp.sqrt(var) + 1e-8)
    o_ref[0] = (xn * s_ref[0] + m_ref[0]).astype(o_ref.dtype)


def pc_lin_adain(pc_p, w, b, im_mean_p, im_std_p):
    """pc_p:(B,N,Dp) bf16  w:(Dp,Fp) bf16  b:(1,Fp) f32  im_mean/std:(B,1,Fp) f32."""
    B, N, Dp = pc_p.shape
    Fp = w.shape[1]
    h, ad = pl.pallas_call(
        partial(_pc_lin_adain_kernel, n_valid=N),
        out_shape=(jax.ShapeDtypeStruct((B, N, Fp), jnp.bfloat16),
                   jax.ShapeDtypeStruct((B, N, Fp), jnp.float32)),
        grid=(B,),
        in_specs=[
            pl.BlockSpec((1, N, Dp), lambda bb: (bb, 0, 0)),
            pl.BlockSpec((Dp, Fp), lambda bb: (0, 0)),
            pl.BlockSpec((1, Fp), lambda bb: (0, 0)),
            pl.BlockSpec((1, 1, Fp), lambda bb: (bb, 0, 0)),
            pl.BlockSpec((1, 1, Fp), lambda bb: (bb, 0, 0)),
        ],
        out_specs=(pl.BlockSpec((1, N, Fp), lambda bb: (bb, 0, 0)),
                   pl.BlockSpec((1, N, Fp), lambda bb: (bb, 0, 0))),
        compiler_params=pltpu.CompilerParams(
            dimension_semantics=("parallel",),
            vmem_limit_bytes=_VMEM_LIMIT),
    )(pc_p, w, b, im_mean_p, im_std_p)
    return h, ad


# --------------------------------------------------------------------------
# Pallas kernel 3: fused, batched GraphX convolution:
#   out[b] = act( (mix @ y[b]) @ W + bias )
# --------------------------------------------------------------------------
def _graphx_kernel(y_ref, mix_ref, w_ref, b_ref, o_ref, *, relu):
    mixed = jnp.dot(mix_ref[...], y_ref[0], preferred_element_type=jnp.float32)
    out = jnp.dot(mixed.astype(jnp.bfloat16), w_ref[...],
                  preferred_element_type=jnp.float32)
    out = out + b_ref[...]
    if relu:
        out = jnp.maximum(out, 0.0)
    o_ref[0] = out.astype(o_ref.dtype)


def graphx_layer(y_p, mix, w, b, relu, out_dtype):
    """y_p:(B,N,Dip) bf16  mix:(N,N) bf16  w:(Dip,Dop) bf16  b:(1,Dop) f32."""
    B, N, Dip = y_p.shape
    Dop = w.shape[1]
    return pl.pallas_call(
        partial(_graphx_kernel, relu=relu),
        out_shape=jax.ShapeDtypeStruct((B, N, Dop), out_dtype),
        grid=(B,),
        in_specs=[
            pl.BlockSpec((1, N, Dip), lambda bb: (bb, 0, 0)),
            pl.BlockSpec((N, N), lambda bb: (0, 0)),
            pl.BlockSpec((Dip, Dop), lambda bb: (0, 0)),
            pl.BlockSpec((1, Dop), lambda bb: (0, 0)),
        ],
        out_specs=pl.BlockSpec((1, N, Dop), lambda bb: (bb, 0, 0)),
        compiler_params=pltpu.CompilerParams(
            dimension_semantics=("parallel",),
            vmem_limit_bytes=_VMEM_LIMIT),
    )(y_p, mix, w, b)


# --------------------------------------------------------------------------
# Conv2d = im2col (bf16 patches, pure slicing glue) + Pallas matmul with
# fused bias/ReLU and pre-packed bf16 weights.
# --------------------------------------------------------------------------
def conv2d_nhwc(x, layer, relu=True):
    """x:(B,H,W,Cin) NHWC bf16, layer holds pre-packed weights."""
    k, s, p, cout = layer["k"], layer["stride"], layer["pad"], layer["cout"]
    xp = jnp.pad(x, ((0, 0), (p, p), (p, p), (0, 0)))
    B, Hp, Wp, C = xp.shape
    Ho = (Hp - k) // s + 1
    Wo = (Wp - k) // s + 1
    cols = []
    for i in range(k):
        for j in range(k):
            cols.append(xp[:, i:i + s * Ho:s, j:j + s * Wo:s, :])
    patches = jnp.concatenate(cols, axis=-1).reshape(B * Ho * Wo, k * k * C)
    # TODO(synk): fuse im2col into a halo-blocked conv kernel to avoid the
    # k*k-expanded patch tensor in HBM; for small cout (4..16) also flip so the
    # spatial axis is the lane dim instead of padding cout to 128.
    out = pallas_matmul(patches, layer["w_mat"], layer["bias"],
                        relu=relu, out_dtype=jnp.bfloat16, n_out=cout)
    return out.reshape(B, Ho, Wo, cout)


# --------------------------------------------------------------------------
# Point projection onto image feature maps (GraphX camera model) + bilinear
# sampling.
# TODO(synk): the data-dependent bilinear gather stays in plain JAX — it has no
# clean rectangular BlockSpec; a manual-DMA gather kernel would be needed.
# --------------------------------------------------------------------------
def bilinear_sample(img_nchw, x, y):
    B, C, H, W = img_nchw.shape
    x0f = jnp.floor(x)
    y0f = jnp.floor(y)
    x0 = jnp.clip(x0f.astype(jnp.int32), 0, W - 1)
    x1 = jnp.clip(x0f.astype(jnp.int32) + 1, 0, W - 1)
    y0 = jnp.clip(y0f.astype(jnp.int32), 0, H - 1)
    y1 = jnp.clip(y0f.astype(jnp.int32) + 1, 0, H - 1)
    bidx = jnp.arange(B)[:, None]
    Ia = img_nchw[bidx, :, y0, x0]   # (B, N, C)
    Ib = img_nchw[bidx, :, y1, x0]
    Ic = img_nchw[bidx, :, y0, x1]
    Id = img_nchw[bidx, :, y1, x1]
    wx = x - x0f
    wy = y - y0f
    wa = ((1.0 - wx) * (1.0 - wy))[..., None]
    wb = ((1.0 - wx) * wy)[..., None]
    wc = (wx * (1.0 - wy))[..., None]
    wd = (wx * wy)[..., None]
    return Ia * wa + Ib * wb + Ic * wc + Id * wd


def project_points(img_feat_nchw, pc):
    B, C, H, W = img_feat_nchw.shape
    X, Y, Z = pc[..., 0], pc[..., 1], pc[..., 2]
    h = 248.0 * Y / Z + 111.5
    w = 248.0 * X / (-Z) + 111.5
    h = jnp.clip(h, 0.0, 223.0)
    w = jnp.clip(w, 0.0, 223.0)
    x = w / (223.0 / (W - 1.0))
    y = h / (223.0 / (H - 1.0))
    return bilinear_sample(img_feat_nchw, x, y)


# --------------------------------------------------------------------------
# Parameter construction (deterministic, in-script). Weights are pre-padded and
# pre-transposed into their MXU layout (bf16) once, here.
# --------------------------------------------------------------------------
CNN_CFG = [
    [(4, 3, 1), (4, 3, 1), (8, 3, 2), (8, 3, 1), (8, 3, 1), (16, 3, 2), (16, 3, 1), (16, 3, 1)],
    [(32, 3, 2), (32, 3, 1), (32, 3, 1)],
    [(64, 5, 2), (64, 3, 1), (64, 3, 1)],
    [(128, 5, 2), (128, 3, 1), (128, 3, 1), (128, 5, 1)],
]
N_POINTS = 128   # in_instances


def init_params(key):
    keys = iter(jax.random.split(key, 64))
    nk = lambda: next(keys)

    cnn = []
    cin = 3
    for blk in CNN_CFG:
        layers = []
        for (cout, k, s) in blk:
            w = jax.random.normal(nk(), (cout, cin, k, k), jnp.float32) * np.sqrt(2.0 / (cin * k * k))
            b = jnp.zeros((cout,), jnp.float32)
            K = k * k * cin
            Kp = _round_up(K, 128)
            Np = _round_up(cout, 128)
            w_mat = jnp.transpose(w, (2, 3, 1, 0)).reshape(K, cout)          # (kh,kw,cin) x cout
            w_mat = jnp.pad(w_mat, ((0, Kp - K), (0, Np - cout))).astype(jnp.bfloat16)
            bias = jnp.pad(b, (0, Np - cout)).reshape(1, Np).astype(jnp.float32)
            layers.append({"w_mat": w_mat, "bias": bias, "cout": cout,
                           "k": k, "stride": s, "pad": k // 2})
            cin = cout
        cnn.append(layers)
    out_features = [blk[-1][0] for blk in CNN_CFG]          # [16, 32, 64, 128]

    # AdaIN point-feature MLP chain: 3 -> f1 -> f2 -> f3 -> f4 (all padded to 128)
    pc_lin = []
    din = 3
    for f in out_features:
        w = jax.random.normal(nk(), (din, f), jnp.float32) * np.sqrt(2.0 / din)
        dinp, fp = _round_up(din, 128), _round_up(f, 128)
        w_p = jnp.pad(w, ((0, dinp - din), (0, fp - f))).astype(jnp.bfloat16)
        b_p = jnp.zeros((1, fp), jnp.float32)
        pc_lin.append({"w": w_p, "b": b_p, "f": f})
        din = f

    # GraphX decoder: in -> in//2 -> in//4 -> 3, point-mixing (N x N) per layer.
    fin = 2 * sum(out_features) + 3
    dims = [fin, fin // 2, fin // 4, 3]
    graphx = []
    for i in range(3):
        di, do = dims[i], dims[i + 1]
        dip, dop = _round_up(di, 128), _round_up(do, 128)
        mix = (jax.random.normal(nk(), (N_POINTS, N_POINTS), jnp.float32)
               * np.sqrt(1.0 / N_POINTS)).astype(jnp.bfloat16)
        w = jax.random.normal(nk(), (di, do), jnp.float32) * np.sqrt(2.0 / di)
        w_p = jnp.pad(w, ((0, dip - di), (0, dop - do))).astype(jnp.bfloat16)
        b_p = jnp.zeros((1, dop), jnp.float32)
        graphx.append({"mix": mix, "w": w_p, "b": b_p, "di": di, "do": do})

    return {"cnn": cnn, "pc_lin": pc_lin, "graphx": graphx, "out_features": out_features}


# --------------------------------------------------------------------------
# Full Graphx_Rec forward.
# --------------------------------------------------------------------------
def graphx_rec_forward(params, img_nchw, init_pc):
    # ---- CNN18-style image encoder (one feature map per block, NCHW f32) ----
    x = jnp.transpose(img_nchw, (0, 2, 3, 1)).astype(jnp.bfloat16)   # NHWC bf16
    img_feats = []
    for blk in params["cnn"]:
        for layer in blk:
            x = conv2d_nhwc(x, layer, relu=True)
        img_feats.append(jnp.transpose(x, (0, 3, 1, 2)).astype(jnp.float32))

    # ---- Point-cloud encoder: [init_pc | projected feats | AdaIN feats] ----
    B, N, _ = init_pc.shape
    feats = [init_pc]
    for f in img_feats:
        feats.append(project_points(f, init_pc))              # (B, N, C_block)

    # Fused linear + ReLU + AdaIN chain (hidden stays padded bf16 between stages).
    Dp0 = params["pc_lin"][0]["w"].shape[0]                    # 128
    h = jnp.pad(init_pc.astype(jnp.bfloat16), ((0, 0), (0, 0), (0, Dp0 - 3)))
    for lin, f in zip(params["pc_lin"], img_feats):
        C = f.shape[1]
        Fp = lin["w"].shape[1]
        im_mean = jnp.mean(f, axis=(2, 3))                     # (B, C)
        im_std = jnp.std(f, axis=(2, 3), ddof=1)               # unbiased, like torch.std
        m_p = jnp.pad(im_mean, ((0, 0), (0, Fp - C))).reshape(B, 1, Fp)
        s_p = jnp.pad(im_std, ((0, 0), (0, Fp - C))).reshape(B, 1, Fp)
        h, ad = pc_lin_adain(h, lin["w"], lin["b"], m_p, s_p)
        feats.append(ad[:, :, :lin["f"]])

    pc_feats = jnp.concatenate(feats, axis=-1)                 # (B, N, 2*sum(out_f)+3)

    # ---- GraphX point-cloud decoder (3 fused, batched GraphX convolutions) ----
    fin = pc_feats.shape[-1]
    dip0 = params["graphx"][0]["w"].shape[0]
    y = jnp.pad(pc_feats.astype(jnp.bfloat16), ((0, 0), (0, 0), (0, dip0 - fin)))
    n_layers = len(params["graphx"])
    for i, g in enumerate(params["graphx"]):
        last = (i == n_layers - 1)
        y = graphx_layer(y, g["mix"], g["w"], g["b"], relu=not last,
                         out_dtype=jnp.float32 if last else jnp.bfloat16)
    out_pc = y[:, :, :3]

    return out_pc, img_feats


if __name__ == "__main__":
    key = jax.random.PRNGKey(0)
    k_img, k_pc, k_par = jax.random.split(key, 3)

    # input: (B=2, C=3, H=64, W=64) NCHW image; init_pc: (B=2, N=128, 3)
    img = jax.random.normal(k_img, (2, 3, 64, 64), jnp.float32)
    init_pc = jax.random.normal(k_pc, (2, N_POINTS, 3), jnp.float32) * 0.5
    init_pc = init_pc.at[..., 2].add(-1.5)   # keep Z away from 0 for projection

    params = init_params(k_par)

    out_pc, img_feats = graphx_rec_forward(params, img, init_pc)
    jax.block_until_ready(out_pc)
    jax.block_until_ready(img_feats)

    assert out_pc.shape == (2, N_POINTS, 3), out_pc.shape
    assert len(img_feats) == 4
    assert img_feats[-1].shape == (2, 128, 2, 2), img_feats[-1].shape
    assert jnp.all(jnp.isfinite(out_pc)), "non-finite output"

    print("KERNEL_OK")
</pallas_src>

<mosaic_0001>
module attributes {stable_mosaic.version = 11 : i64} {
  func.func @_matmul_kernel(%arg0: i32, %arg1: i32, %arg2: memref<512x128xbf16, #tpu.memory_space<vmem>>, %arg3: memref<128x128xbf16, #tpu.memory_space<vmem>>, %arg4: memref<1x128xf32, #tpu.memory_space<vmem>>, %arg5: memref<512x128xbf16, #tpu.memory_space<vmem>>) attributes {dimension_semantics = [#tpu.dimension_semantics<parallel>, #tpu.dimension_semantics<parallel>], iteration_bounds = array<i64: 16, 1>, scalar_prefetch = 0 : i64, scratch_operands = 0 : i64, tpu.core_type = #tpu.core_type<tc>, window_params = [{transform_indices = @transform_0, window_bounds = array<i64: 512, 128>}, {transform_indices = @transform_1, window_bounds = array<i64: 128, 128>}, {transform_indices = @transform_2, window_bounds = array<i64: 1, 128>}, {transform_indices = @transform_3, window_bounds = array<i64: 512, 128>}]} {
    %c0 = arith.constant 0 : index
    %c0_0 = arith.constant 0 : index
    %0 = vector.load %arg2[%c0, %c0_0] : memref<512x128xbf16, #tpu.memory_space<vmem>>, vector<512x128xbf16>
    %c0_1 = arith.constant 0 : index
    %c0_2 = arith.constant 0 : index
    %1 = vector.load %arg3[%c0_1, %c0_2] : memref<128x128xbf16, #tpu.memory_space<vmem>>, vector<128x128xbf16>
    %cst = arith.constant dense<0.000000e+00> : vector<512x128xf32>
    %2 = tpu.matmul %0, %1, %cst {dimension_numbers = #tpu.dot_dimension_numbers<[1], [0], [0], [1], [0, 0, 1, 1], [], []>} : vector<512x128xbf16>, vector<128x128xbf16>, vector<512x128xf32> -> vector<512x128xf32>
    %c0_3 = arith.constant 0 : index
    %c0_4 = arith.constant 0 : index
    %3 = vector.load %arg4[%c0_3, %c0_4] : memref<1x128xf32, #tpu.memory_space<vmem>>, vector<1x128xf32>
    %4 = vector.broadcast %3 : vector<1x128xf32> to vector<512x128xf32>
    %5 = arith.addf %2, %4 : vector<512x128xf32>
    %cst_5 = arith.constant 0.000000e+00 : f32
    %6 = vector.broadcast %cst_5 : f32 to vector<512x128xf32>
    %7 = arith.maximumf %5, %6 : vector<512x128xf32>
    %8 = arith.truncf %7 : vector<512x128xf32> to vector<512x128xbf16>
    %c0_6 = arith.constant 0 : index
    %c0_7 = arith.constant 0 : index
    %9 = vector.load %arg5[%c0_6, %c0_7] : memref<512x128xbf16, #tpu.memory_space<vmem>>, vector<512x128xbf16>
    tpu.vector_store %arg5[%c0_6, %c0_7], %8 {strides = array<i32>} : memref<512x128xbf16, #tpu.memory_space<vmem>>, vector<512x128xbf16>,
    return
  }
  func.func @transform_0(%arg0: i32, %arg1: i32) -> (i32, i32) {
    %c0_i32 = arith.constant 0 : i32
    %c0_i32_0 = arith.constant 0 : i32
    return %arg0, %c0_i32 : i32, i32
  }
  func.func @transform_1(%arg0: i32, %arg1: i32) -> (i32, i32) {
    %c0_i32 = arith.constant 0 : i32
    %c0_i32_0 = arith.constant 0 : i32
    return %c0_i32, %arg1 : i32, i32
  }
  func.func @transform_2(%arg0: i32, %arg1: i32) -> (i32, i32) {
    %c0_i32 = arith.constant 0 : i32
    %c0_i32_0 = arith.constant 0 : i32
    return %c0_i32, %arg1 : i32, i32
  }
  func.func @transform_3(%arg0: i32, %arg1: i32) -> (i32, i32) {
    %c0_i32 = arith.constant 0 : i32
    return %arg0, %arg1 : i32, i32
  }
}

</mosaic_0001>

<llo_original>
// kernel: tpu_custom_call.1
$region0: #{tpu_custom_call.1}
  #allocation0 [shape = 'u32[]', space=smem, size = 0x4, offset = 0x4, fixed_abs, tag = 'smem constant byte address 0x4 - core index']
  #allocation1 [shape = 'u32[144,128]{1,0:T(1,128)}', space=vmem, size = 0x12000, scoped, tag = 'internal scratch']
  %s0 = inlined_call_operand.hbm [shape: bf16[8192,128], index: 0, kind: input, shape index: {}]
  %s1 = inlined_call_operand.hbm [shape: bf16[128,128], index: 1, kind: input, shape index: {}]
  %s2 = inlined_call_operand.hbm [shape: f32[1,128], index: 2, kind: input, shape index: {}]
  %s3 = inlined_call_operand.hbm [shape: bf16[8192,128], index: 3, kind: output, shape index: {}]
  %s4 = sld [smem:[#allocation0]]
  $region57: #{tpu_custom_call.1} parent=0
    _
  %s6 = ssub.s32 1, %s4
  %s7 = scalar_select 0, %s6, %s4
  $region1: #{tpu_custom_call.1} parent=0
    #allocation2 [shape = 'u8[262144]{0}', space=vmem, size = 0x40000, scoped, tag = 'input window, operand 0']
    #allocation3 [shape = 's32[2]{0}', space=sflag, size = 0x8, scoped, tag = 'scoped memory for tpu_custom_call.1']
    #allocation4 [shape = 's32[2]{0}', space=sflag, size = 0x8, scoped, tag = 'scoped memory for tpu_custom_call.1']
    #allocation5 [shape = 'u8[32768]{0}', space=vmem, size = 0x8000, scoped, tag = 'input window, operand 1, single buffered']
    #allocation6 [shape = 's32[1]{0}', space=sflag, size = 0x4, scoped, tag = 'scoped memory for tpu_custom_call.1']
    #allocation7 [shape = 'u8[512]{0}', space=vmem, size = 0x400, scoped, tag = 'input window, operand 2, single buffered']
    #allocation8 [shape = 'u8[262144]{0}', space=vmem, size = 0x40000, scoped, tag = 'output window, operand 0']
    %8 = vsyncpa [#allocation3], 0
    %s9 = scalar_lea.sflag [#allocation3], 1
    %10 = vsyncpa %s9, 0
    %11 = vsyncpa [#allocation6], 0
    %12 = vsyncpa [#allocation4], 0
    %s13 = scalar_lea.sflag [#allocation4], 1
    %14 = vsyncpa %s13, 0
    loop: start=0, step=1, limit=18
    $region2: #{tpu_custom_call.1} parent=1 // loop_pre_header
      _
    $region3: #{tpu_custom_call.1} parent=1 // loop_header
      %s16 = sphi 0, %s20
      %p17 = scmp.ge.s32.totalorder %s16, 18
      %s23 = sphi 0, %s35
      %s24 = sphi 0, %s31
      %s25 = sphi 0, %s23
      %s26 = sphi 0, %s24
      %s27 = sphi 0, %s25
      %s28 = sphi 0, %s26
      %s38 = sphi 0, %s40
      %s41 = sphi 0, %s38
      %s42 = sphi 0, %s41
      %s58 = sphi 0, %s42
      %s64 = sphi 0, %s66
      %s67 = sphi 0, %s64
      %s68 = sphi 0, %s67
      %s84 = sphi 0, %s68
      %s90 = sphi 0, %s92
      %s93 = sphi 0, %s90
      %s94 = sphi 0, %s93
      %s110 = sphi 0, %s94
      %s118 = sphi 0, %s120
      %s121 = sphi 0, %s118
      %s122 = sphi 0, %s121
      %s138 = sphi 0, %s122
    $region4: #{tpu_custom_call.1} parent=1 // loop_header_branch
      %19 = sbr.rel (%p17) target = $region8
    $region5: #{tpu_custom_call.1} parent=1 // loop_body
      %s21 = ssub.s32 %s16, 1
      %s22 = ssub.s32 %s16, 2
      %s29 = sadd.s32 1, %s24
      %p30 = scmp.ge.s32.totalorder %s29, 1
      %s31 = scalar_select %p30, 0, %s29
      %s32 = sadd.s32 1, %s23
      %s33 = scalar_select %p30, %s32, %s23
      %p34 = scmp.ge.s32.totalorder %s33, 16
      %s35 = scalar_select %p34, 0, %s33
      %s36 = ssub.s32 %s23, %s35
      %p37 = scmp.eq.s32.totalorder %s36, 0
      %s39 = sadd.s32 %s38, 1
      %s40 = scalar_select %p37, %s38, %s39
      %p43 = pneg %p37
      %p44 = scmp.eq.s32.totalorder %s16, 15
      %p45 = por %p43, %p44
      %p46 = scmp.ne.s32.totalorder %s38, %s41
      %p47 = scmp.eq.s32.totalorder %s16, 0
      %p48 = por %p46, %p47
      %p49 = scmp.ne.s32.totalorder %s38, %s41
      %p50 = scmp.eq.s32.totalorder %s21, 15
      %p51 = por %p49, %p50
      %p52 = scmp.ne.s32.totalorder %s41, %s42
      %p53 = scmp.eq.s32.totalorder %s21, 0
      %p54 = por %p52, %p53
      %p55 = scmp.ne.s32.totalorder %s41, %s42
      %p56 = scmp.eq.s32.totalorder %s22, 15
      %p57 = por %p55, %p56
      %p59 = scmp.ne.s32.totalorder %s42, %s58
      %p60 = scmp.eq.s32.totalorder %s22, 0
      %p61 = por %p59, %p60
      %s62 = ssub.s32 %s24, %s31
      %p63 = scmp.eq.s32.totalorder %s62, 0
      %s65 = sadd.s32 %s64, 1
      %s66 = scalar_select %p63, %s64, %s65
      %p69 = pneg %p63
      %p70 = scmp.eq.s32.totalorder %s16, 15
      %p71 = por %p69, %p70
      %p72 = scmp.ne.s32.totalorder %s64, %s67
      %p73 = scmp.eq.s32.totalorder %s16, 0
      %p74 = por %p72, %p73
      %p75 = scmp.ne.s32.totalorder %s64, %s67
      %p76 = scmp.eq.s32.totalorder %s21, 15
      %p77 = por %p75, %p76
      %p78 = scmp.ne.s32.totalorder %s67, %s68
      %p79 = scmp.eq.s32.totalorder %s21, 0
      %p80 = por %p78, %p79
      %p81 = scmp.ne.s32.totalorder %s67, %s68
      %p82 = scmp.eq.s32.totalorder %s22, 15
      %p83 = por %p81, %p82
      %p85 = scmp.ne.s32.totalorder %s68, %s84
      %p86 = scmp.eq.s32.totalorder %s22, 0
      %p87 = por %p85, %p86
      %s88 = ssub.s32 %s24, %s31
      %p89 = scmp.eq.s32.totalorder %s88, 0
      %s91 = sadd.s32 %s90, 1
      %s92 = scalar_select %p89, %s90, %s91
      %p95 = pneg %p89
      %p96 = scmp.eq.s32.totalorder %s16, 15
      %p97 = por %p95, %p96
      %p98 = scmp.ne.s32.totalorder %s90, %s93
      %p99 = scmp.eq.s32.totalorder %s16, 0
      %p100 = por %p98, %p99
      %p101 = scmp.ne.s32.totalorder %s90, %s93
      %p102 = scmp.eq.s32.totalorder %s21, 15
      %p103 = por %p101, %p102
      %p104 = scmp.ne.s32.totalorder %s93, %s94
      %p105 = scmp.eq.s32.totalorder %s21, 0
      %p106 = por %p104, %p105
      %p107 = scmp.ne.s32.totalorder %s93, %s94
      %p108 = scmp.eq.s32.totalorder %s22, 15
      %p109 = por %p107, %p108
      %p111 = scmp.ne.s32.totalorder %s94, %s110
      %p112 = scmp.eq.s32.totalorder %s22, 0
      %p113 = por %p111, %p112
      %s114 = ssub.s32 %s23, %s35
      %s115 = ssub.s32 %s24, %s31
      %s116 = sor.u32 %s114, %s115
      %p117 = scmp.eq.s32.totalorder %s116, 0
      %s119 = sadd.s32 %s118, 1
      %s120 = scalar_select %p117, %s118, %s119
      %p123 = pneg %p117
      %p124 = scmp.eq.s32.totalorder %s16, 15
      %p125 = por %p123, %p124
      %p126 = scmp.ne.s32.totalorder %s118, %s121
      %p127 = scmp.eq.s32.totalorder %s16, 0
      %p128 = por %p126, %p127
      %p129 = scmp.ne.s32.totalorder %s118, %s121
      %p130 = scmp.eq.s32.totalorder %s21, 15
      %p131 = por %p129, %p130
      %p132 = scmp.ne.s32.totalorder %s121, %s122
      %p133 = scmp.eq.s32.totalorder %s21, 0
      %p134 = por %p132, %p133
      %p135 = scmp.ne.s32.totalorder %s121, %s122
      %p136 = scmp.eq.s32.totalorder %s22, 15
      %p137 = por %p135, %p136
      %p139 = scmp.ne.s32.totalorder %s122, %s138
      %p140 = scmp.eq.s32.totalorder %s22, 0
      %p141 = por %p139, %p140
      %p142 = scmp.le.s32.totalorder 1, %s16
      %p143 = scmp.lt.s32.totalorder %s16, 17
      %p144 = pnand %p142, %p143
      %p145 = pneg %p144
      // Predicated region
      $region9: #{tpu_custom_call.1} parent=5 // pred_check
        _
      $region10: #{tpu_custom_call.1} parent=5 // pred_check_branch
        %147 = sbr.rel (%p144) target = $region12
      $region11: #{tpu_custom_call.1} parent=5 // pred_region
        %s148 = ssub.s32 %s16, 1
        // Predicated region
        $region13: #{tpu_custom_call.1} parent=11 // pred_check
          %p149 = pneg %p80
        $region14: #{tpu_custom_call.1} parent=11 // pred_check_branch
          %151 = sbr.rel (%p149) target = $region16
        $region15: #{tpu_custom_call.1} parent=11 // pred_region
          %s153 = ssub.s32 1024, 1024
          %154 = vsyncadd [#allocation6], %s153
          %s155 = smul.addr %s26, 64
          %s156 = scalar_lea.hbm %s1, %s155
          %s157 = sshll.u32 [#allocation5], 4
          %s158 = int_to_ptr.vmem [resolvable:$true] %s157
          %163 = dma.hbm_to_vmem [thread:$0]  %s156, 1024, %s158, [#allocation6], 64, 64, 4
        $region16: #{tpu_custom_call.1} parent=11 // pred_fallthru
          _
        // Predicated region
        $region17: #{tpu_custom_call.1} parent=11 // pred_check
          %p164 = pneg %p106
        $region18: #{tpu_custom_call.1} parent=11 // pred_check_branch
          %166 = sbr.rel (%p164) target = $region20
        $region19: #{tpu_custom_call.1} parent=11 // pred_region
          %s168 = ssub.s32 16, 16
          %169 = vsyncadd [#allocation6], %s168
          %s170 = smul.addr %s26, 16
          %s171 = scalar_lea.hbm %s2, %s170
          %s173 = sshll.u32 [#allocation7], 4
          %s174 = int_to_ptr.vmem [resolvable:$true] %s173
          %176 = dma.hbm_to_vmem [thread:$0]  %s171, 16, %s174, [#allocation6]
        $region20: #{tpu_custom_call.1} parent=11 // pred_fallthru
          _
      $region12: #{tpu_custom_call.1} parent=5 // pred_fallthru
        _
      %p177 = scmp.lt.s32.totalorder %s16, 16
      // Predicated region
      $region21: #{tpu_custom_call.1} parent=5 // pred_check
        %p178 = pneg %p177
      $region22: #{tpu_custom_call.1} parent=5 // pred_check_branch
        %180 = sbr.rel (%p178) target = $region24
      $region23: #{tpu_custom_call.1} parent=5 // pred_region
        // Predicated region
        $region25: #{tpu_custom_call.1} parent=23 // pred_check
          %p181 = pneg %p48
        $region26: #{tpu_custom_call.1} parent=23 // pred_check_branch
          %183 = sbr.rel (%p181) target = $region28
        $region27: #{tpu_custom_call.1} parent=23 // pred_region
          %s184 = sand.u32 %s38, 1
          %s185 = scalar_lea.sflag [#allocation3], %s184
          %s186 = sand.u32 %s38, 1
          %s187 = smul.addr %s186, 256
          %s188 = scalar_lea.vmem [#allocation2], %s187
          %s189 = smul.u32 64, %s23
          %s191 = ssub.s32 4096, 4096
          %192 = vsyncadd %s185, %s191
          %s193 = smul.addr %s189, 64
          %s194 = scalar_lea.hbm %s0, %s193
          %s195 = sshll.u32 %s188, 4
          %s196 = int_to_ptr.vmem [resolvable:$true] %s195
          %201 = dma.hbm_to_vmem [thread:$0]  %s194, 4096, %s196, %s185, 64, 64, 4
        $region28: #{tpu_custom_call.1} parent=23 // pred_fallthru
          _
      $region24: #{tpu_custom_call.1} parent=5 // pred_fallthru
        _
      %p202 = scmp.le.s32.totalorder 1, %s16
      %p203 = scmp.lt.s32.totalorder %s16, 17
      %p204 = pnand %p202, %p203
      %p205 = pneg %p204
      // Predicated region
      $region29: #{tpu_custom_call.1} parent=5 // pred_check
        _
      $region30: #{tpu_custom_call.1} parent=5 // pred_check_branch
        %207 = sbr.rel (%p204) target = $region32
      $region31: #{tpu_custom_call.1} parent=5 // pred_region
        %s208 = ssub.s32 %s16, 1
        %s209 = sand.u32 %s41, 1
        %s210 = scalar_lea.sflag [#allocation3], %s209
        %s211 = sand.u32 %s41, 1
        %s212 = smul.addr %s211, 256
        %s213 = scalar_lea.vmem [#allocation2], %s212
        // Predicated region
        $region33: #{tpu_custom_call.1} parent=31 // pred_check
          %p214 = pneg %p54
        $region34: #{tpu_custom_call.1} parent=31 // pred_check_branch
          %216 = sbr.rel (%p214) target = $region36
        $region35: #{tpu_custom_call.1} parent=31 // pred_region
          %217 = dma.done %s210, 4096
        $region36: #{tpu_custom_call.1} parent=31 // pred_fallthru
          _
        // Predicated region
        $region37: #{tpu_custom_call.1} parent=31 // pred_check
          %p218 = pneg %p80
        $region38: #{tpu_custom_call.1} parent=31 // pred_check_branch
          %220 = sbr.rel (%p218) target = $region40
        $region39: #{tpu_custom_call.1} parent=31 // pred_region
          %221 = dma.done [#allocation6], 1024
        $region40: #{tpu_custom_call.1} parent=31 // pred_fallthru
          _
        // Predicated region
        $region41: #{tpu_custom_call.1} parent=31 // pred_check
          %p222 = pneg %p106
        $region42: #{tpu_custom_call.1} parent=31 // pred_check_branch
          %224 = sbr.rel (%p222) target = $region44
        $region43: #{tpu_custom_call.1} parent=31 // pred_region
          %225 = dma.done [#allocation6], 16
        $region44: #{tpu_custom_call.1} parent=31 // pred_fallthru
          _
        %s226 = sand.u32 %s41, 1
        %s227 = scalar_lea.sflag [#allocation3], %s226
        %s228 = sand.u32 %s41, 1
        %s229 = smul.addr %s228, 256
        %s230 = scalar_lea.vmem [#allocation2], %s229
        %p231 = pneg %p54
        %p232 = pneg %p51
        %p233 = pneg %p80
        %p234 = pneg %p77
        %p235 = pneg %p106
        %p236 = pneg %p103
        %p237 = pneg %p134
        %p238 = pneg %p131
        %s239 = sand.u32 %s121, 1
        %s240 = scalar_lea.sflag [#allocation4], %s239
        %s241 = sand.u32 %s121, 1
        %s242 = smul.addr %s241, 256
        %s243 = scalar_lea.vmem [#allocation8], %s242
        %s244 = smul.u32 64, %s25
        %s245 = smul.u32 64, %s25
        %v247 = vld [vmem:[%s213] sm:$0xf]
        %v248 = vld [vmem:[%s213 + $0x4] sm:$0xf]
        %v249 = vld [vmem:[%s213 + $0x8] sm:$0xf]
        %v250 = vld [vmem:[%s213 + $0xc] sm:$0xf]
        %v251 = vld [vmem:[%s213 + $0x10] sm:$0xf]
        %v252 = vld [vmem:[%s213 + $0x14] sm:$0xf]
        %v253 = vld [vmem:[%s213 + $0x18] sm:$0xf]
        %v254 = vld [vmem:[%s213 + $0x1c] sm:$0xf]
        %v255 = vld [vmem:[%s213 + $0x20] sm:$0xf]
        %v256 = vld [vmem:[%s213 + $0x24] sm:$0xf]
        %v257 = vld [vmem:[%s213 + $0x28] sm:$0xf]
        %v258 = vld [vmem:[%s213 + $0x2c] sm:$0xf]
        %v259 = vld [vmem:[%s213 + $0x30] sm:$0xf]
        %v260 = vld [vmem:[%s213 + $0x34] sm:$0xf]
        %v261 = vld [vmem:[%s213 + $0x38] sm:$0xf]
        %v262 = vld [vmem:[%s213 + $0x3c] sm:$0xf]
        %v263 = vld [vmem:[%s213 + $0x40] sm:$0xf]
        %v264 = vld [vmem:[%s213 + $0x44] sm:$0xf]
        %v265 = vld [vmem:[%s213 + $0x48] sm:$0xf]
        %v266 = vld [vmem:[%s213 + $0x4c] sm:$0xf]
        %v267 = vld [vmem:[%s213 + $0x50] sm:$0xf]
        %v268 = vld [vmem:[%s213 + $0x54] sm:$0xf]
        %v269 = vld [vmem:[%s213 + $0x58] sm:$0xf]
        %v270 = vld [vmem:[%s213 + $0x5c] sm:$0xf]
        %v271 = vld [vmem:[%s213 + $0x60] sm:$0xf]
        %v272 = vld [vmem:[%s213 + $0x64] sm:$0xf]
        %v273 = vld [vmem:[%s213 + $0x68] sm:$0xf]
        %v274 = vld [vmem:[%s213 + $0x6c] sm:$0xf]
        %v275 = vld [vmem:[%s213 + $0x70] sm:$0xf]
        %v276 = vld [vmem:[%s213 + $0x74] sm:$0xf]
        %v277 = vld [vmem:[%s213 + $0x78] sm:$0xf]
        %v278 = vld [vmem:[%s213 + $0x7c] sm:$0xf]
        %v279 = vld [vmem:[%s213 + $0x80] sm:$0xf]
        %v280 = vld [vmem:[%s213 + $0x84] sm:$0xf]
        %v281 = vld [vmem:[%s213 + $0x88] sm:$0xf]
        %v282 = vld [vmem:[%s213 + $0x8c] sm:$0xf]
        %v283 = vld [vmem:[%s213 + $0x90] sm:$0xf]
        %v284 = vld [vmem:[%s213 + $0x94] sm:$0xf]
        %v285 = vld [vmem:[%s213 + $0x98] sm:$0xf]
        %v286 = vld [vmem:[%s213 + $0x9c] sm:$0xf]
        %v287 = vld [vmem:[%s213 + $0xa0] sm:$0xf]
        %v288 = vld [vmem:[%s213 + $0xa4] sm:$0xf]
        %v289 = vld [vmem:[%s213 + $0xa8] sm:$0xf]
        %v290 = vld [vmem:[%s213 + $0xac] sm:$0xf]
        %v291 = vld [vmem:[%s213 + $0xb0] sm:$0xf]
        %v292 = vld [vmem:[%s213 + $0xb4] sm:$0xf]
        %v293 = vld [vmem:[%s213 + $0xb8] sm:$0xf]
        %v294 = vld [vmem:[%s213 + $0xbc] sm:$0xf]
        %v295 = vld [vmem:[%s213 + $0xc0] sm:$0xf]
        %v296 = vld [vmem:[%s213 + $0xc4] sm:$0xf]
        %v297 = vld [vmem:[%s213 + $0xc8] sm:$0xf]
        %v298 = vld [vmem:[%s213 + $0xcc] sm:$0xf]
        %v299 = vld [vmem:[%s213 + $0xd0] sm:$0xf]
        %v300 = vld [vmem:[%s213 + $0xd4] sm:$0xf]
        %v301 = vld [vmem:[%s213 + $0xd8] sm:$0xf]
        %v302 = vld [vmem:[%s213 + $0xdc] sm:$0xf]
        %v303 = vld [vmem:[%s213 + $0xe0] sm:$0xf]
        %v304 = vld [vmem:[%s213 + $0xe4] sm:$0xf]
        %v305 = vld [vmem:[%s213 + $0xe8] sm:$0xf]
        %v306 = vld [vmem:[%s213 + $0xec] sm:$0xf]
        %v307 = vld [vmem:[%s213 + $0xf0] sm:$0xf]
        %v308 = vld [vmem:[%s213 + $0xf4] sm:$0xf]
        %v309 = vld [vmem:[%s213 + $0xf8] sm:$0xf]
        %v310 = vld [vmem:[%s213 + $0xfc] sm:$0xf]
        %v311 = vld [vmem:[#allocation5] sm:$0xf]
        %v312 = vld [vmem:[#allocation5 + $0x4] sm:$0xf]
        %v313 = vld [vmem:[#allocation5 + $0x8] sm:$0xf]
        %v314 = vld [vmem:[#allocation5 + $0xc] sm:$0xf]
        %v315 = vld [vmem:[#allocation5 + $0x10] sm:$0xf]
        %v316 = vld [vmem:[#allocation5 + $0x14] sm:$0xf]
        %v317 = vld [vmem:[#allocation5 + $0x18] sm:$0xf]
        %v318 = vld [vmem:[#allocation5 + $0x1c] sm:$0xf]
        %v319 = vld [vmem:[#allocation5 + $0x20] sm:$0xf]
        %v320 = vld [vmem:[#allocation5 + $0x24] sm:$0xf]
        %v321 = vld [vmem:[#allocation5 + $0x28] sm:$0xf]
        %v322 = vld [vmem:[#allocation5 + $0x2c] sm:$0xf]
        %v323 = vld [vmem:[#allocation5 + $0x30] sm:$0xf]
        %v324 = vld [vmem:[#allocation5 + $0x34] sm:$0xf]
        %v325 = vld [vmem:[#allocation5 + $0x38] sm:$0xf]
        %v326 = vld [vmem:[#allocation5 + $0x3c] sm:$0xf]
        %v327 = vld [vmem:[#allocation7] sm:$0x1]
        %v329 = vlaneseq
        %v330 = vshrl.u32 %v329, 7
        %v331 = vsub.s32 0, %v330
        %v332 = vrot.slane %v327, %v331
        %v398 = vunpack.c.l.b16 %v247
        %v399 = vunpack.c.l.b16 %v248
        %v400 = vunpack.c.l.b16 %v249
        %v401 = vunpack.c.l.b16 %v250
        %v402 = vunpack.c.l.b16 %v251
        %v403 = vunpack.c.l.b16 %v252
        %v404 = vunpack.c.l.b16 %v253
        %v405 = vunpack.c.l.b16 %v254
        %v406 = vunpack.c.l.b16 %v255
        %v407 = vunpack.c.l.b16 %v256
        %v408 = vunpack.c.l.b16 %v257
        %v409 = vunpack.c.l.b16 %v258
        %v410 = vunpack.c.l.b16 %v259
        %v411 = vunpack.c.l.b16 %v260
        %v412 = vunpack.c.l.b16 %v261
        %v413 = vunpack.c.l.b16 %v262
        %v414 = vunpack.c.l.b16 %v263
        %v415 = vunpack.c.l.b16 %v264
        %v416 = vunpack.c.l.b16 %v265
        %v417 = vunpack.c.l.b16 %v266
        %v418 = vunpack.c.l.b16 %v267
        %v419 = vunpack.c.l.b16 %v268
        %v420 = vunpack.c.l.b16 %v269
        %v421 = vunpack.c.l.b16 %v270
        %v422 = vunpack.c.l.b16 %v271
        %v423 = vunpack.c.l.b16 %v272
        %v424 = vunpack.c.l.b16 %v273
        %v425 = vunpack.c.l.b16 %v274
        %v426 = vunpack.c.l.b16 %v275
        %v427 = vunpack.c.l.b16 %v276
        %v428 = vunpack.c.l.b16 %v277
        %v429 = vunpack.c.l.b16 %v278
        %v430 = vunpack.c.l.b16 %v279
        %v431 = vunpack.c.l.b16 %v280
        %v432 = vunpack.c.l.b16 %v281
        %v433 = vunpack.c.l.b16 %v282
        %v434 = vunpack.c.l.b16 %v283
        %v435 = vunpack.c.l.b16 %v284
        %v436 = vunpack.c.l.b16 %v285
        %v437 = vunpack.c.l.b16 %v286
        %v438 = vunpack.c.l.b16 %v287
        %v439 = vunpack.c.l.b16 %v288
        %v440 = vunpack.c.l.b16 %v289
        %v441 = vunpack.c.l.b16 %v290
        %v442 = vunpack.c.l.b16 %v291
        %v443 = vunpack.c.l.b16 %v292
        %v444 = vunpack.c.l.b16 %v293
        %v445 = vunpack.c.l.b16 %v294
        %v446 = vunpack.c.l.b16 %v295
        %v447 = vunpack.c.l.b16 %v296
        %v448 = vunpack.c.l.b16 %v297
        %v449 = vunpack.c.l.b16 %v298
        %v450 = vunpack.c.l.b16 %v299
        %v451 = vunpack.c.l.b16 %v300
        %v452 = vunpack.c.l.b16 %v301
        %v453 = vunpack.c.l.b16 %v302
        %v454 = vunpack.c.l.b16 %v303
        %v455 = vunpack.c.l.b16 %v304
        %v456 = vunpack.c.l.b16 %v305
        %v457 = vunpack.c.l.b16 %v306
        %v458 = vunpack.c.l.b16 %v307
        %v459 = vunpack.c.l.b16 %v308
        %v460 = vunpack.c.l.b16 %v309
        %v461 = vunpack.c.l.b16 %v310
        %v462 = vpack.c.b16 %v399, %v398
        %v463 = vpack.c.b16 %v401, %v400
        %v464 = vpack.c.b16 %v403, %v402
        %v465 = vpack.c.b16 %v405, %v404
        %v466 = vpack.c.b16 %v407, %v406
        %v467 = vpack.c.b16 %v409, %v408
        %v468 = vpack.c.b16 %v411, %v410
        %v469 = vpack.c.b16 %v413, %v412
        %v470 = vpack.c.b16 %v415, %v414
        %v471 = vpack.c.b16 %v417, %v416
        %v472 = vpack.c.b16 %v419, %v418
        %v473 = vpack.c.b16 %v421, %v420
        %v474 = vpack.c.b16 %v423, %v422
        %v475 = vpack.c.b16 %v425, %v424
        %v476 = vpack.c.b16 %v427, %v426
        %v477 = vpack.c.b16 %v429, %v428
        %v478 = vpack.c.b16 %v431, %v430
        %v479 = vpack.c.b16 %v433, %v432
        %v480 = vpack.c.b16 %v435, %v434
        %v481 = vpack.c.b16 %v437, %v436
        %v482 = vpack.c.b16 %v439, %v438
        %v483 = vpack.c.b16 %v441, %v440
        %v484 = vpack.c.b16 %v443, %v442
        %v485 = vpack.c.b16 %v445, %v444
        %v486 = vpack.c.b16 %v447, %v446
        %v487 = vpack.c.b16 %v449, %v448
        %v488 = vpack.c.b16 %v451, %v450
        %v489 = vpack.c.b16 %v453, %v452
        %v490 = vpack.c.b16 %v455, %v454
        %v491 = vpack.c.b16 %v457, %v456
        %v492 = vpack.c.b16 %v459, %v458
        %v493 = vpack.c.b16 %v461, %v460
        %v542 = vunpack.c.l.b16 %v311
        %v543 = vunpack.c.l.b16 %v312
        %v544 = vunpack.c.l.b16 %v313
        %v545 = vunpack.c.l.b16 %v314
        %v546 = vunpack.c.l.b16 %v315
        %v547 = vunpack.c.l.b16 %v316
        %v548 = vunpack.c.l.b16 %v317
        %v549 = vunpack.c.l.b16 %v318
        %v550 = vunpack.c.l.b16 %v319
        %v551 = vunpack.c.l.b16 %v320
        %v552 = vunpack.c.l.b16 %v321
        %v553 = vunpack.c.l.b16 %v322
        %v554 = vunpack.c.l.b16 %v323
        %v555 = vunpack.c.l.b16 %v324
        %v556 = vunpack.c.l.b16 %v325
        %v557 = vunpack.c.l.b16 %v326
        %v558 = vpack.c.b16 %v543, %v542
        %v559 = vpack.c.b16 %v545, %v544
        %v560 = vpack.c.b16 %v547, %v546
        %v561 = vpack.c.b16 %v549, %v548
        %v562 = vpack.c.b16 %v551, %v550
        %v563 = vpack.c.b16 %v553, %v552
        %v564 = vpack.c.b16 %v555, %v554
        %v565 = vpack.c.b16 %v557, %v556
        %574 = vmatprep.subr.bf16.mxu0 0
        %575 = vmatpush1.bf16.msra.mxu0 %v565
        %576 = vmatprep.subr.bf16.mxu0 0
        %577 = vmatpush1.bf16.msra.mxu0 %v564
        %578 = vmatprep.subr.bf16.mxu0 0
        %579 = vmatpush1.bf16.msra.mxu0 %v563
        %580 = vmatprep.subr.bf16.mxu0 0
        %581 = vmatpush1.bf16.msra.mxu0 %v562
        %582 = vmatprep.subr.bf16.mxu0 0
        %583 = vmatpush1.bf16.msra.mxu0 %v561
        %584 = vmatprep.subr.bf16.mxu0 0
        %585 = vmatpush1.bf16.msra.mxu0 %v560
        %586 = vmatprep.subr.bf16.mxu0 0
        %587 = vmatpush1.bf16.msra.mxu0 %v559
        %588 = vmatprep.subr.bf16.mxu0 0
        %589 = vmatpush1.bf16.msra.mxu0 %v558
        %590 = vmatprep.subr.bf16.mxu0 0
        %591 = vmatpush2.bf16.msra.mxu0 0
        %592 = vmatprep.subr.bf16.mxu0 0
        %593 = vmatpush2.bf16.msra.mxu0 0
        %594 = vmatprep.subr.bf16.mxu0 0
        %595 = vmatpush2.bf16.msra.mxu0 0
        %596 = vmatprep.subr.bf16.mxu0 0
        %597 = vmatpush2.bf16.msra.mxu0 0
        %598 = vmatprep.subr.bf16.mxu0 0
        %599 = vmatpush2.bf16.msra.mxu0 0
        %600 = vmatprep.subr.bf16.mxu0 0
        %601 = vmatpush2.bf16.msra.mxu0 0
        %602 = vmatprep.subr.bf16.mxu0 0
        %603 = vmatpush2.bf16.msra.mxu0 0
        %604 = vmatprep.subr.bf16.mxu0 0
        %605 = vmatpush2.bf16.msra.mxu0 0
        %606 = vmatprep.mubr.bf16.mxu0 0
        %607 = vmatmul.mubr.bf16.gmra.mxu0 %v462
        %v608 = vpop.f32.mrf.mxu0
        %v609 = vadd.f32 %v332, %v608
        %v610 = vpop.f32.mrf.mxu0
        %v611 = vpop.f32.mrf.mxu0
        %v612 = vadd.f32 %v332, %v611
        %v613 = vpop.f32.mrf.mxu0
        %614 = vmatprep.mubr.bf16.mxu0 0
        %615 = vmatmul.mubr.bf16.gmra.mxu0 %v463
        %v616 = vpop.f32.mrf.mxu0
        %v617 = vadd.f32 %v332, %v616
        %v618 = vpop.f32.mrf.mxu0
        %v619 = vpop.f32.mrf.mxu0
        %v620 = vadd.f32 %v332, %v619
        %v621 = vpop.f32.mrf.mxu0
        %622 = vmatprep.mubr.bf16.mxu0 0
        %623 = vmatmul.mubr.bf16.gmra.mxu0 %v464
        %v624 = vpop.f32.mrf.mxu0
        %v625 = vadd.f32 %v332, %v624
        %v626 = vpop.f32.mrf.mxu0
        %v627 = vpop.f32.mrf.mxu0
        %v628 = vadd.f32 %v332, %v627
        %v629 = vpop.f32.mrf.mxu0
        %630 = vmatprep.mubr.bf16.mxu0 0
        %631 = vmatmul.mubr.bf16.gmra.mxu0 %v465
        %v632 = vpop.f32.mrf.mxu0
        %v633 = vadd.f32 %v332, %v632
        %v634 = vpop.f32.mrf.mxu0
        %v635 = vpop.f32.mrf.mxu0
        %v636 = vadd.f32 %v332, %v635
        %v637 = vpop.f32.mrf.mxu0
        %638 = vmatprep.mubr.bf16.mxu0 0
        %639 = vmatmul.mubr.bf16.gmra.mxu0 %v466
        %v640 = vpop.f32.mrf.mxu0
        %v641 = vadd.f32 %v332, %v640
        %v642 = vpop.f32.mrf.mxu0
        %v643 = vpop.f32.mrf.mxu0
        %v644 = vadd.f32 %v332, %v643
        %v645 = vpop.f32.mrf.mxu0
        %646 = vmatprep.mubr.bf16.mxu0 0
        %647 = vmatmul.mubr.bf16.gmra.mxu0 %v467
        %v648 = vpop.f32.mrf.mxu0
        %v649 = vadd.f32 %v332, %v648
        %v650 = vpop.f32.mrf.mxu0
        %v651 = vpop.f32.mrf.mxu0
        %v652 = vadd.f32 %v332, %v651
        %v653 = vpop.f32.mrf.mxu0
        %654 = vmatprep.mubr.bf16.mxu0 0
        %655 = vmatmul.mubr.bf16.gmra.mxu0 %v468
        %v656 = vpop.f32.mrf.mxu0
        %v657 = vadd.f32 %v332, %v656
        %v658 = vpop.f32.mrf.mxu0
        %v659 = vpop.f32.mrf.mxu0
        %v660 = vadd.f32 %v332, %v659
        %v661 = vpop.f32.mrf.mxu0
        %662 = vmatprep.mubr.bf16.mxu0 0
        %663 = vmatmul.mubr.bf16.gmra.mxu0 %v469
        %v664 = vpop.f32.mrf.mxu0
        %v665 = vadd.f32 %v332, %v664
        %v666 = vpop.f32.mrf.mxu0
        %v667 = vpop.f32.mrf.mxu0
        %v668 = vadd.f32 %v332, %v667
        %v669 = vpop.f32.mrf.mxu0
        %670 = vmatprep.mubr.bf16.mxu0 0
        %671 = vmatmul.mubr.bf16.gmra.mxu0 %v470
        %v672 = vpop.f32.mrf.mxu0
        %v673 = vadd.f32 %v332, %v672
        %v674 = vpop.f32.mrf.mxu0
        %v675 = vpop.f32.mrf.mxu0
        %v676 = vadd.f32 %v332, %v675
        %v677 = vpop.f32.mrf.mxu0
        %678 = vmatprep.mubr.bf16.mxu0 0
        %679 = vmatmul.mubr.bf16.gmra.mxu0 %v471
        %v680 = vpop.f32.mrf.mxu0
        %v681 = vadd.f32 %v332, %v680
        %v682 = vpop.f32.mrf.mxu0
        %v683 = vpop.f32.mrf.mxu0
        %v684 = vadd.f32 %v332, %v683
        %v685 = vpop.f32.mrf.mxu0
        %686 = vmatprep.mubr.bf16.mxu0 0
        %687 = vmatmul.mubr.bf16.gmra.mxu0 %v472
        %v688 = vpop.f32.mrf.mxu0
        %v689 = vadd.f32 %v332, %v688
        %v690 = vpop.f32.mrf.mxu0
        %v691 = vpop.f32.mrf.mxu0
        %v692 = vadd.f32 %v332, %v691
        %v693 = vpop.f32.mrf.mxu0
        %694 = vmatprep.mubr.bf16.mxu0 0
        %695 = vmatmul.mubr.bf16.gmra.mxu0 %v473
        %v696 = vpop.f32.mrf.mxu0
        %v697 = vadd.f32 %v332, %v696
        %v698 = vpop.f32.mrf.mxu0
        %v699 = vpop.f32.mrf.mxu0
        %v700 = vadd.f32 %v332, %v699
        %v701 = vpop.f32.mrf.mxu0
        %702 = vmatprep.mubr.bf16.mxu0 0
        %703 = vmatmul.mubr.bf16.gmra.mxu0 %v474
        %v704 = vpop.f32.mrf.mxu0
        %v705 = vadd.f32 %v332, %v704
        %v706 = vpop.f32.mrf.mxu0
        %v707 = vpop.f32.mrf.mxu0
        %v708 = vadd.f32 %v332, %v707
        %v709 = vpop.f32.mrf.mxu0
        %710 = vmatprep.mubr.bf16.mxu0 0
        %711 = vmatmul.mubr.bf16.gmra.mxu0 %v475
        %v712 = vpop.f32.mrf.mxu0
        %v713 = vadd.f32 %v332, %v712
        %v714 = vpop.f32.mrf.mxu0
        %v715 = vpop.f32.mrf.mxu0
        %v716 = vadd.f32 %v332, %v715
        %v717 = vpop.f32.mrf.mxu0
        %718 = vmatprep.mubr.bf16.mxu0 0
        %719 = vmatmul.mubr.bf16.gmra.mxu0 %v476
        %v720 = vpop.f32.mrf.mxu0
        %v721 = vadd.f32 %v332, %v720
        %v722 = vpop.f32.mrf.mxu0
        %v723 = vpop.f32.mrf.mxu0
        %v724 = vadd.f32 %v332, %v723
        %v725 = vpop.f32.mrf.mxu0
        %726 = vmatprep.mubr.bf16.mxu0 0
        %727 = vmatmul.mubr.bf16.gmra.mxu0 %v477
        %v728 = vpop.f32.mrf.mxu0
        %v729 = vadd.f32 %v332, %v728
        %v730 = vpop.f32.mrf.mxu0
        %v731 = vpop.f32.mrf.mxu0
        %v732 = vadd.f32 %v332, %v731
        %v733 = vpop.f32.mrf.mxu0
        %734 = vmatprep.mubr.bf16.mxu0 0
        %735 = vmatmul.mubr.bf16.gmra.mxu0 %v478
        %v736 = vpop.f32.mrf.mxu0
        %v737 = vadd.f32 %v332, %v736
        %v738 = vpop.f32.mrf.mxu0
        %v739 = vpop.f32.mrf.mxu0
        %v740 = vadd.f32 %v332, %v739
        %v741 = vpop.f32.mrf.mxu0
        %742 = vmatprep.mubr.bf16.mxu0 0
        %743 = vmatmul.mubr.bf16.gmra.mxu0 %v479
        %v744 = vpop.f32.mrf.mxu0
        %v745 = vadd.f32 %v332, %v744
        %v746 = vpop.f32.mrf.mxu0
        %v747 = vpop.f32.mrf.mxu0
        %v748 = vadd.f32 %v332, %v747
        %v749 = vpop.f32.mrf.mxu0
        %750 = vmatprep.mubr.bf16.mxu0 0
        %751 = vmatmul.mubr.bf16.gmra.mxu0 %v480
        %v752 = vpop.f32.mrf.mxu0
        %v753 = vadd.f32 %v332, %v752
        %v754 = vpop.f32.mrf.mxu0
        %v755 = vpop.f32.mrf.mxu0
        %v756 = vadd.f32 %v332, %v755
        %v757 = vpop.f32.mrf.mxu0
        %758 = vmatprep.mubr.bf16.mxu0 0
        %759 = vmatmul.mubr.bf16.gmra.mxu0 %v481
        %v760 = vpop.f32.mrf.mxu0
        %v761 = vadd.f32 %v332, %v760
        %v762 = vpop.f32.mrf.mxu0
        %v763 = vpop.f32.mrf.mxu0
        %v764 = vadd.f32 %v332, %v763
        %v765 = vpop.f32.mrf.mxu0
        %766 = vmatprep.mubr.bf16.mxu0 0
        %767 = vmatmul.mubr.bf16.gmra.mxu0 %v482
        %v768 = vpop.f32.mrf.mxu0
        %v769 = vadd.f32 %v332, %v768
        %v770 = vpop.f32.mrf.mxu0
        %v771 = vpop.f32.mrf.mxu0
        %v772 = vadd.f32 %v332, %v771
        %v773 = vpop.f32.mrf.mxu0
        %774 = vmatprep.mubr.bf16.mxu0 0
        %775 = vmatmul.mubr.bf16.gmra.mxu0 %v483
        %v776 = vpop.f32.mrf.mxu0
        %v777 = vadd.f32 %v332, %v776
        %v778 = vpop.f32.mrf.mxu0
        %v779 = vpop.f32.mrf.mxu0
        %v780 = vadd.f32 %v332, %v779
        %v781 = vpop.f32.mrf.mxu0
        %782 = vmatprep.mubr.bf16.mxu0 0
        %783 = vmatmul.mubr.bf16.gmra.mxu0 %v484
        %v784 = vpop.f32.mrf.mxu0
        %v785 = vadd.f32 %v332, %v784
        %v786 = vpop.f32.mrf.mxu0
        %v787 = vpop.f32.mrf.mxu0
        %v788 = vadd.f32 %v332, %v787
        %v789 = vpop.f32.mrf.mxu0
        %790 = vmatprep.mubr.bf16.mxu0 0
        %791 = vmatmul.mubr.bf16.gmra.mxu0 %v485
        %v792 = vpop.f32.mrf.mxu0
        %v793 = vadd.f32 %v332, %v792
        %v794 = vpop.f32.mrf.mxu0
        %v795 = vpop.f32.mrf.mxu0
        %v796 = vadd.f32 %v332, %v795
        %v797 = vpop.f32.mrf.mxu0
        %798 = vmatprep.mubr.bf16.mxu0 0
        %799 = vmatmul.mubr.bf16.gmra.mxu0 %v486
        %v800 = vpop.f32.mrf.mxu0
        %v801 = vadd.f32 %v332, %v800
        %v802 = vpop.f32.mrf.mxu0
        %v803 = vpop.f32.mrf.mxu0
        %v804 = vadd.f32 %v332, %v803
        %v805 = vpop.f32.mrf.mxu0
        %806 = vmatprep.mubr.bf16.mxu0 0
        %807 = vmatmul.mubr.bf16.gmra.mxu0 %v487
        %v808 = vpop.f32.mrf.mxu0
        %v809 = vadd.f32 %v332, %v808
        %v810 = vpop.f32.mrf.mxu0
        %v811 = vpop.f32.mrf.mxu0
        %v812 = vadd.f32 %v332, %v811
        %v813 = vpop.f32.mrf.mxu0
        %814 = vmatprep.mubr.bf16.mxu0 0
        %815 = vmatmul.mubr.bf16.gmra.mxu0 %v488
        %v816 = vpop.f32.mrf.mxu0
        %v817 = vadd.f32 %v332, %v816
        %v818 = vpop.f32.mrf.mxu0
        %v819 = vpop.f32.mrf.mxu0
        %v820 = vadd.f32 %v332, %v819
        %v821 = vpop.f32.mrf.mxu0
        %822 = vmatprep.mubr.bf16.mxu0 0
        %823 = vmatmul.mubr.bf16.gmra.mxu0 %v489
        %v824 = vpop.f32.mrf.mxu0
        %v825 = vadd.f32 %v332, %v824
        %v826 = vpop.f32.mrf.mxu0
        %v827 = vpop.f32.mrf.mxu0
        %v828 = vadd.f32 %v332, %v827
        %v829 = vpop.f32.mrf.mxu0
        %830 = vmatprep.mubr.bf16.mxu0 0
        %831 = vmatmul.mubr.bf16.gmra.mxu0 %v490
        %v832 = vpop.f32.mrf.mxu0
        %v833 = vadd.f32 %v332, %v832
        %v834 = vpop.f32.mrf.mxu0
        %v835 = vpop.f32.mrf.mxu0
        %v836 = vadd.f32 %v332, %v835
        %v837 = vpop.f32.mrf.mxu0
        %838 = vmatprep.mubr.bf16.mxu0 0
        %839 = vmatmul.mubr.bf16.gmra.mxu0 %v491
        %v840 = vpop.f32.mrf.mxu0
        %v841 = vadd.f32 %v332, %v840
        %v842 = vpop.f32.mrf.mxu0
        %v843 = vpop.f32.mrf.mxu0
        %v844 = vadd.f32 %v332, %v843
        %v845 = vpop.f32.mrf.mxu0
        %846 = vmatprep.mubr.bf16.mxu0 0
        %847 = vmatmul.mubr.bf16.gmra.mxu0 %v492
        %v848 = vpop.f32.mrf.mxu0
        %v849 = vadd.f32 %v332, %v848
        %v850 = vpop.f32.mrf.mxu0
        %v851 = vpop.f32.mrf.mxu0
        %v852 = vadd.f32 %v332, %v851
        %v853 = vpop.f32.mrf.mxu0
        %854 = vmatprep.mubr.bf16.mxu0 0
        %855 = vmatmul.mubr.bf16.gmra.mxu0 %v493
        %v856 = vpop.f32.mrf.mxu0
        %v857 = vadd.f32 %v332, %v856
        %v858 = vpop.f32.mrf.mxu0
        %v859 = vpop.f32.mrf.mxu0
        %v860 = vadd.f32 %v332, %v859
        %v861 = vpop.f32.mrf.mxu0
        %862 = vdwg.mxu0
        %v863 = vmax.f32 %v609, 0.0
        %v864 = vmax.f32 %v612, 0.0
        %v865 = vmax.f32 %v617, 0.0
        %v866 = vmax.f32 %v620, 0.0
        %v867 = vmax.f32 %v625, 0.0
        %v868 = vmax.f32 %v628, 0.0
        %v869 = vmax.f32 %v633, 0.0
        %v870 = vmax.f32 %v636, 0.0
        %v871 = vmax.f32 %v641, 0.0
        %v872 = vmax.f32 %v644, 0.0
        %v873 = vmax.f32 %v649, 0.0
        %v874 = vmax.f32 %v652, 0.0
        %v875 = vmax.f32 %v657, 0.0
        %v876 = vmax.f32 %v660, 0.0
        %v877 = vmax.f32 %v665, 0.0
        %v878 = vmax.f32 %v668, 0.0
        %v879 = vmax.f32 %v673, 0.0
        %v880 = vmax.f32 %v676, 0.0
        %v881 = vmax.f32 %v681, 0.0
        %v882 = vmax.f32 %v684, 0.0
        %v883 = vmax.f32 %v689, 0.0
        %v884 = vmax.f32 %v692, 0.0
        %v885 = vmax.f32 %v697, 0.0
        %v886 = vmax.f32 %v700, 0.0
        %v887 = vmax.f32 %v705, 0.0
        %v888 = vmax.f32 %v708, 0.0
        %v889 = vmax.f32 %v713, 0.0
        %v890 = vmax.f32 %v716, 0.0
        %v891 = vmax.f32 %v721, 0.0
        %v892 = vmax.f32 %v724, 0.0
        %v893 = vmax.f32 %v729, 0.0
        %v894 = vmax.f32 %v732, 0.0
        %v895 = vmax.f32 %v737, 0.0
        %v896 = vmax.f32 %v740, 0.0
        %v897 = vmax.f32 %v745, 0.0
        %v898 = vmax.f32 %v748, 0.0
        %v899 = vmax.f32 %v753, 0.0
        %v900 = vmax.f32 %v756, 0.0
        %v901 = vmax.f32 %v761, 0.0
        %v902 = vmax.f32 %v764, 0.0
        %v903 = vmax.f32 %v769, 0.0
        %v904 = vmax.f32 %v772, 0.0
        %v905 = vmax.f32 %v777, 0.0
        %v906 = vmax.f32 %v780, 0.0
        %v907 = vmax.f32 %v785, 0.0
        %v908 = vmax.f32 %v788, 0.0
        %v909 = vmax.f32 %v793, 0.0
        %v910 = vmax.f32 %v796, 0.0
        %v911 = vmax.f32 %v801, 0.0
        %v912 = vmax.f32 %v804, 0.0
        %v913 = vmax.f32 %v809, 0.0
        %v914 = vmax.f32 %v812, 0.0
        %v915 = vmax.f32 %v817, 0.0
        %v916 = vmax.f32 %v820, 0.0
        %v917 = vmax.f32 %v825, 0.0
        %v918 = vmax.f32 %v828, 0.0
        %v919 = vmax.f32 %v833, 0.0
        %v920 = vmax.f32 %v836, 0.0
        %v921 = vmax.f32 %v841, 0.0
        %v922 = vmax.f32 %v844, 0.0
        %v923 = vmax.f32 %v849, 0.0
        %v924 = vmax.f32 %v852, 0.0
        %v925 = vmax.f32 %v857, 0.0
        %v926 = vmax.f32 %v860, 0.0
        %v927 = vpack.c.bf16 %v864, %v863
        %v928 = vpack.c.bf16 %v866, %v865
        %v929 = vpack.c.bf16 %v868, %v867
        %v930 = vpack.c.bf16 %v870, %v869
        %v931 = vpack.c.bf16 %v872, %v871
        %v932 = vpack.c.bf16 %v874, %v873
        %v933 = vpack.c.bf16 %v876, %v875
        %v934 = vpack.c.bf16 %v878, %v877
        %v935 = vpack.c.bf16 %v880, %v879
        %v936 = vpack.c.bf16 %v882, %v881
        %v937 = vpack.c.bf16 %v884, %v883
        %v938 = vpack.c.bf16 %v886, %v885
        %v939 = vpack.c.bf16 %v888, %v887
        %v940 = vpack.c.bf16 %v890, %v889
        %v941 = vpack.c.bf16 %v892, %v891
        %v942 = vpack.c.bf16 %v894, %v893
        %v943 = vpack.c.bf16 %v896, %v895
        %v944 = vpack.c.bf16 %v898, %v897
        %v945 = vpack.c.bf16 %v900, %v899
        %v946 = vpack.c.bf16 %v902, %v901
        %v947 = vpack.c.bf16 %v904, %v903
        %v948 = vpack.c.bf16 %v906, %v905
        %v949 = vpack.c.bf16 %v908, %v907
        %v950 = vpack.c.bf16 %v910, %v909
        %v951 = vpack.c.bf16 %v912, %v911
        %v952 = vpack.c.bf16 %v914, %v913
        %v953 = vpack.c.bf16 %v916, %v915
        %v954 = vpack.c.bf16 %v918, %v917
        %v955 = vpack.c.bf16 %v920, %v919
        %v956 = vpack.c.bf16 %v922, %v921
        %v957 = vpack.c.bf16 %v924, %v923
        %v958 = vpack.c.bf16 %v926, %v925
        %v991 = vunpack.c.l.b16 %v927
        %v992 = vunpack.c.h.b16 %v927
        %v993 = vunpack.c.l.b16 %v928
        %v994 = vunpack.c.h.b16 %v928
        %v995 = vunpack.c.l.b16 %v929
        %v996 = vunpack.c.h.b16 %v929
        %v997 = vunpack.c.l.b16 %v930
        %v998 = vunpack.c.h.b16 %v930
        %v999 = vunpack.c.l.b16 %v931
        %v1000 = vunpack.c.h.b16 %v931
        %v1001 = vunpack.c.l.b16 %v932
        %v1002 = vunpack.c.h.b16 %v932
        %v1003 = vunpack.c.l.b16 %v933
        %v1004 = vunpack.c.h.b16 %v933
        %v1005 = vunpack.c.l.b16 %v934
        %v1006 = vunpack.c.h.b16 %v934
        %v1007 = vunpack.c.l.b16 %v935
        %v1008 = vunpack.c.h.b16 %v935
        %v1009 = vunpack.c.l.b16 %v936
        %v1010 = vunpack.c.h.b16 %v936
        %v1011 = vunpack.c.l.b16 %v937
        %v1012 = vunpack.c.h.b16 %v937
        %v1013 = vunpack.c.l.b16 %v938
        %v1014 = vunpack.c.h.b16 %v938
        %v1015 = vunpack.c.l.b16 %v939
        %v1016 = vunpack.c.h.b16 %v939
        %v1017 = vunpack.c.l.b16 %v940
        %v1018 = vunpack.c.h.b16 %v940
        %v1019 = vunpack.c.l.b16 %v941
        %v1020 = vunpack.c.h.b16 %v941
        %v1021 = vunpack.c.l.b16 %v942
        %v1022 = vunpack.c.h.b16 %v942
        %v1023 = vunpack.c.l.b16 %v943
        %v1024 = vunpack.c.h.b16 %v943
        %v1025 = vunpack.c.l.b16 %v944
        %v1026 = vunpack.c.h.b16 %v944
        %v1027 = vunpack.c.l.b16 %v945
        %v1028 = vunpack.c.h.b16 %v945
        %v1029 = vunpack.c.l.b16 %v946
        %v1030 = vunpack.c.h.b16 %v946
        %v1031 = vunpack.c.l.b16 %v947
        %v1032 = vunpack.c.h.b16 %v947
        %v1033 = vunpack.c.l.b16 %v948
        %v1034 = vunpack.c.h.b16 %v948
        %v1035 = vunpack.c.l.b16 %v949
        %v1036 = vunpack.c.h.b16 %v949
        %v1037 = vunpack.c.l.b16 %v950
        %v1038 = vunpack.c.h.b16 %v950
        %v1039 = vunpack.c.l.b16 %v951
        %v1040 = vunpack.c.h.b16 %v951
        %v1041 = vunpack.c.l.b16 %v952
        %v1042 = vunpack.c.h.b16 %v952
        %v1043 = vunpack.c.l.b16 %v953
        %v1044 = vunpack.c.h.b16 %v953
        %v1045 = vunpack.c.l.b16 %v954
        %v1046 = vunpack.c.h.b16 %v954
        %v1047 = vunpack.c.l.b16 %v955
        %v1048 = vunpack.c.h.b16 %v955
        %v1049 = vunpack.c.l.b16 %v956
        %v1050 = vunpack.c.h.b16 %v956
        %v1051 = vunpack.c.l.b16 %v957
        %v1052 = vunpack.c.h.b16 %v957
        %v1053 = vunpack.c.l.b16 %v958
        %v1054 = vunpack.c.h.b16 %v958
        %v1055 = vpack.c.b16 %v991, %v991
        %v1056 = vpack.c.b16 %v992, %v992
        %v1057 = vpack.c.b16 %v993, %v993
        %v1058 = vpack.c.b16 %v994, %v994
        %v1059 = vpack.c.b16 %v995, %v995
        %v1060 = vpack.c.b16 %v996, %v996
        %v1061 = vpack.c.b16 %v997, %v997
        %v1062 = vpack.c.b16 %v998, %v998
        %v1063 = vpack.c.b16 %v999, %v999
        %v1064 = vpack.c.b16 %v1000, %v1000
        %v1065 = vpack.c.b16 %v1001, %v1001
        %v1066 = vpack.c.b16 %v1002, %v1002
        %v1067 = vpack.c.b16 %v1003, %v1003
        %v1068 = vpack.c.b16 %v1004, %v1004
        %v1069 = vpack.c.b16 %v1005, %v1005
        %v1070 = vpack.c.b16 %v1006, %v1006
        %v1071 = vpack.c.b16 %v1007, %v1007
        %v1072 = vpack.c.b16 %v1008, %v1008
        %v1073 = vpack.c.b16 %v1009, %v1009
        %v1074 = vpack.c.b16 %v1010, %v1010
        %v1075 = vpack.c.b16 %v1011, %v1011
        %v1076 = vpack.c.b16 %v1012, %v1012
        %v1077 = vpack.c.b16 %v1013, %v1013
        %v1078 = vpack.c.b16 %v1014, %v1014
        %v1079 = vpack.c.b16 %v1015, %v1015
        %v1080 = vpack.c.b16 %v1016, %v1016
        %v1081 = vpack.c.b16 %v1017, %v1017
        %v1082 = vpack.c.b16 %v1018, %v1018
        %v1083 = vpack.c.b16 %v1019, %v1019
        %v1084 = vpack.c.b16 %v1020, %v1020
        %v1085 = vpack.c.b16 %v1021, %v1021
        %v1086 = vpack.c.b16 %v1022, %v1022
        %v1087 = vpack.c.b16 %v1023, %v1023
        %v1088 = vpack.c.b16 %v1024, %v1024
        %v1089 = vpack.c.b16 %v1025, %v1025
        %v1090 = vpack.c.b16 %v1026, %v1026
        %v1091 = vpack.c.b16 %v1027, %v1027
        %v1092 = vpack.c.b16 %v1028, %v1028
        %v1093 = vpack.c.b16 %v1029, %v1029
        %v1094 = vpack.c.b16 %v1030, %v1030
        %v1095 = vpack.c.b16 %v1031, %v1031
        %v1096 = vpack.c.b16 %v1032, %v1032
        %v1097 = vpack.c.b16 %v1033, %v1033
        %v1098 = vpack.c.b16 %v1034, %v1034
        %v1099 = vpack.c.b16 %v1035, %v1035
        %v1100 = vpack.c.b16 %v1036, %v1036
        %v1101 = vpack.c.b16 %v1037, %v1037
        %v1102 = vpack.c.b16 %v1038, %v1038
        %v1103 = vpack.c.b16 %v1039, %v1039
        %v1104 = vpack.c.b16 %v1040, %v1040
        %v1105 = vpack.c.b16 %v1041, %v1041
        %v1106 = vpack.c.b16 %v1042, %v1042
        %v1107 = vpack.c.b16 %v1043, %v1043
        %v1108 = vpack.c.b16 %v1044, %v1044
        %v1109 = vpack.c.b16 %v1045, %v1045
        %v1110 = vpack.c.b16 %v1046, %v1046
        %v1111 = vpack.c.b16 %v1047, %v1047
        %v1112 = vpack.c.b16 %v1048, %v1048
        %v1113 = vpack.c.b16 %v1049, %v1049
        %v1114 = vpack.c.b16 %v1050, %v1050
        %v1115 = vpack.c.b16 %v1051, %v1051
        %v1116 = vpack.c.b16 %v1052, %v1052
        %v1117 = vpack.c.b16 %v1053, %v1053
        %v1118 = vpack.c.b16 %v1054, %v1054
        %1183 = vst [vmem:[%s243] sm:$0xf] %v1055
        %1184 = vst [vmem:[%s243 + $0x4] sm:$0xf] %v1056
        %1185 = vst [vmem:[%s243 + $0x8] sm:$0xf] %v1057
        %1186 = vst [vmem:[%s243 + $0xc] sm:$0xf] %v1058
        %1187 = vst [vmem:[%s243 + $0x10] sm:$0xf] %v1059
        %1188 = vst [vmem:[%s243 + $0x14] sm:$0xf] %v1060
        %1189 = vst [vmem:[%s243 + $0x18] sm:$0xf] %v1061
        %1190 = vst [vmem:[%s243 + $0x1c] sm:$0xf] %v1062
        %1191 = vst [vmem:[%s243 + $0x20] sm:$0xf] %v1063
        %1192 = vst [vmem:[%s243 + $0x24] sm:$0xf] %v1064
        %1193 = vst [vmem:[%s243 + $0x28] sm:$0xf] %v1065
        %1194 = vst [vmem:[%s243 + $0x2c] sm:$0xf] %v1066
        %1195 = vst [vmem:[%s243 + $0x30] sm:$0xf] %v1067
        %1196 = vst [vmem:[%s243 + $0x34] sm:$0xf] %v1068
        %1197 = vst [vmem:[%s243 + $0x38] sm:$0xf] %v1069
        %1198 = vst [vmem:[%s243 + $0x3c] sm:$0xf] %v1070
        %1199 = vst [vmem:[%s243 + $0x40] sm:$0xf] %v1071
        %1200 = vst [vmem:[%s243 + $0x44] sm:$0xf] %v1072
        %1201 = vst [vmem:[%s243 + $0x48] sm:$0xf] %v1073
        %1202 = vst [vmem:[%s243 + $0x4c] sm:$0xf] %v1074
        %1203 = vst [vmem:[%s243 + $0x50] sm:$0xf] %v1075
        %1204 = vst [vmem:[%s243 + $0x54] sm:$0xf] %v1076
        %1205 = vst [vmem:[%s243 + $0x58] sm:$0xf] %v1077
        %1206 = vst [vmem:[%s243 + $0x5c] sm:$0xf] %v1078
        %1207 = vst [vmem:[%s243 + $0x60] sm:$0xf] %v1079
        %1208 = vst [vmem:[%s243 + $0x64] sm:$0xf] %v1080
        %1209 = vst [vmem:[%s243 + $0x68] sm:$0xf] %v1081
        %1210 = vst [vmem:[%s243 + $0x6c] sm:$0xf] %v1082
        %1211 = vst [vmem:[%s243 + $0x70] sm:$0xf] %v1083
        %1212 = vst [vmem:[%s243 + $0x74] sm:$0xf] %v1084
        %1213 = vst [vmem:[%s243 + $0x78] sm:$0xf] %v1085
        %1214 = vst [vmem:[%s243 + $0x7c] sm:$0xf] %v1086
        %1215 = vst [vmem:[%s243 + $0x80] sm:$0xf] %v1087
        %1216 = vst [vmem:[%s243 + $0x84] sm:$0xf] %v1088
        %1217 = vst [vmem:[%s243 + $0x88] sm:$0xf] %v1089
        %1218 = vst [vmem:[%s243 + $0x8c] sm:$0xf] %v1090
        %1219 = vst [vmem:[%s243 + $0x90] sm:$0xf] %v1091
        %1220 = vst [vmem:[%s243 + $0x94] sm:$0xf] %v1092
        %1221 = vst [vmem:[%s243 + $0x98] sm:$0xf] %v1093
        %1222 = vst [vmem:[%s243 + $0x9c] sm:$0xf] %v1094
        %1223 = vst [vmem:[%s243 + $0xa0] sm:$0xf] %v1095
        %1224 = vst [vmem:[%s243 + $0xa4] sm:$0xf] %v1096
        %1225 = vst [vmem:[%s243 + $0xa8] sm:$0xf] %v1097
        %1226 = vst [vmem:[%s243 + $0xac] sm:$0xf] %v1098
        %1227 = vst [vmem:[%s243 + $0xb0] sm:$0xf] %v1099
        %1228 = vst [vmem:[%s243 + $0xb4] sm:$0xf] %v1100
        %1229 = vst [vmem:[%s243 + $0xb8] sm:$0xf] %v1101
        %1230 = vst [vmem:[%s243 + $0xbc] sm:$0xf] %v1102
        %1231 = vst [vmem:[%s243 + $0xc0] sm:$0xf] %v1103
        %1232 = vst [vmem:[%s243 + $0xc4] sm:$0xf] %v1104
        %1233 = vst [vmem:[%s243 + $0xc8] sm:$0xf] %v1105
        %1234 = vst [vmem:[%s243 + $0xcc] sm:$0xf] %v1106
        %1235 = vst [vmem:[%s243 + $0xd0] sm:$0xf] %v1107
        %1236 = vst [vmem:[%s243 + $0xd4] sm:$0xf] %v1108
        %1237 = vst [vmem:[%s243 + $0xd8] sm:$0xf] %v1109
        %1238 = vst [vmem:[%s243 + $0xdc] sm:$0xf] %v1110
        %1239 = vst [vmem:[%s243 + $0xe0] sm:$0xf] %v1111
        %1240 = vst [vmem:[%s243 + $0xe4] sm:$0xf] %v1112
        %1241 = vst [vmem:[%s243 + $0xe8] sm:$0xf] %v1113
        %1242 = vst [vmem:[%s243 + $0xec] sm:$0xf] %v1114
        %1243 = vst [vmem:[%s243 + $0xf0] sm:$0xf] %v1115
        %1244 = vst [vmem:[%s243 + $0xf4] sm:$0xf] %v1116
        %1245 = vst [vmem:[%s243 + $0xf8] sm:$0xf] %v1117
        %1246 = vst [vmem:[%s243 + $0xfc] sm:$0xf] %v1118
        %s1247 = sand.u32 %s121, 1
        %s1248 = scalar_lea.sflag [#allocation4], %s1247
        %s1249 = sand.u32 %s121, 1
        %s1250 = smul.addr %s1249, 256
        %s1251 = scalar_lea.vmem [#allocation8], %s1250
        // Predicated region
        $region45: #{tpu_custom_call.1} parent=31 // pred_check
          %p1252 = pneg %p131
        $region46: #{tpu_custom_call.1} parent=31 // pred_check_branch
          %1254 = sbr.rel (%p1252) target = $region48
        $region47: #{tpu_custom_call.1} parent=31 // pred_region
          %s1255 = smul.u32 64, %s25
          %s1257 = ssub.s32 4096, 4096
          %1258 = vsyncadd %s1248, %s1257
          %s1259 = sadd.s32 %s26, %s1255
          %s1260 = smul.addr %s1259, 64
          %s1261 = scalar_lea.hbm %s3, %s1260
          %s1262 = sshll.u32 %s1251, 4
          %s1263 = int_to_ptr.vmem [resolvable:$true] %s1262
          %1268 = dma.vmem_to_hbm [thread:$0]  %s1263, 4096, %s1261, %s1248, 64, 64, 4
        $region48: #{tpu_custom_call.1} parent=31 // pred_fallthru
          _
      $region32: #{tpu_custom_call.1} parent=5 // pred_fallthru
        _
      %p1269 = scmp.le.s32.totalorder 2, %s16
      // Predicated region
      $region49: #{tpu_custom_call.1} parent=5 // pred_check
        %p1270 = pneg %p1269
      $region50: #{tpu_custom_call.1} parent=5 // pred_check_branch
        %1272 = sbr.rel (%p1270) target = $region52
      $region51: #{tpu_custom_call.1} parent=5 // pred_region
        %s1273 = ssub.s32 %s16, 2
        // Predicated region
        $region53: #{tpu_custom_call.1} parent=51 // pred_check
          %p1274 = pneg %p137
        $region54: #{tpu_custom_call.1} parent=51 // pred_check_branch
          %1276 = sbr.rel (%p1274) target = $region56
        $region55: #{tpu_custom_call.1} parent=51 // pred_region
          %s1277 = sand.u32 %s122, 1
          %s1278 = scalar_lea.sflag [#allocation4], %s1277
          %s1279 = sand.u32 %s122, 1
          %s1280 = smul.addr %s1279, 256
          %s1281 = scalar_lea.vmem [#allocation8], %s1280
          %1282 = dma.done %s1278, 4096
        $region56: #{tpu_custom_call.1} parent=51 // pred_fallthru
          _
      $region52: #{tpu_custom_call.1} parent=5 // pred_fallthru
        _
    $region6: #{tpu_custom_call.1} parent=1 // loop_footer
      %s20 = sadd.s32 1, %s16
    $region7: #{tpu_custom_call.1} parent=1 // loop_footer_branch
      %15 = sbr.rel target = $region3
    $region8: #{tpu_custom_call.1} parent=1 // loop_exit
      _
    %1283 = vsyncpa [#allocation3], 1
    %s1284 = scalar_lea.sflag [#allocation3], 1
    %1285 = vsyncpa %s1284, 1
    %1286 = vsyncpa [#allocation6], 1
    %1287 = vsyncpa [#allocation4], 1
    %s1288 = scalar_lea.sflag [#allocation4], 1
    %1289 = vsyncpa %s1288, 1

</llo_original>
